<compile_context>
chip_gen: v7x
topology: tpu7x:2x2x1
jax: 0.10.0
libtpu: 0.0.40
codegen_flags: <defaults>
</compile_context>

<pallas_src>
import functools

import jax
import jax.numpy as jnp
from jax import lax
from jax.experimental import pallas as pl
from jax.experimental.pallas import tpu as pltpu

_LANES = 128
_SUBLANES = 8
_VREG_ELEMS = _SUBLANES * _LANES  # 1024 f32 elements per vreg

# murmur3 fmix32 constants (two's-complement int32 values) — fallback path only.
_C1 = -2048144789        # 0x85EBCA6B
_C2 = -1028477387        # 0xC2B2AE35
_GOLDEN = -1640531527    # 0x9E3779B9

_TWO_PI = 6.283185307179586
_INV_2_24 = 1.0 / 16777216.0       # 2**-24
_FLOAT_ONE_BITS = 0x3F800000       # bit pattern of 1.0f


def _round_up(x, m):
    return (x + m - 1) // m * m


# ---------------------------------------------------------------------------
# Main path: hardware PRNG + paired-output Box-Muller.
# ---------------------------------------------------------------------------

def _bits_to_float12(bits):
    """32 random bits -> f32 uniform in [1, 2) via the exponent trick."""
    if bits.dtype != jnp.uint32:
        bits = pltpu.bitcast(bits, jnp.uint32)
    mant = (bits >> 9) | jnp.uint32(_FLOAT_ONE_BITS)
    return pltpu.bitcast(mant, jnp.float32)


def _gaussian_noise_kernel_hw(seed_ref, x_ref, o_ref, *, mean, std):
    """out = x + (N(0,1) * std + mean), noise from the hardware PRNG."""
    r, c = x_ref.shape
    # Per-tile independent stream; results do not depend on core sharding.
    pltpu.prng_seed(seed_ref[0], pl.program_id(0))

    if r >= 2 * _SUBLANES:
        # One Box-Muller pair feeds two output elements: cos -> top half rows,
        # sin -> bottom half rows. Halves the transcendental + uniform work.
        half = r // 2
        u1 = 2.0 - _bits_to_float12(pltpu.prng_random_bits((half, c)))  # (0,1]
        u2 = _bits_to_float12(pltpu.prng_random_bits((half, c))) - 1.0  # [0,1)
        radius = jnp.sqrt(-2.0 * jnp.log(u1)) * std
        theta = _TWO_PI * u2
        top = x_ref[pl.ds(0, half), :].astype(jnp.float32) \
            + (radius * jnp.cos(theta) + mean)
        bot = x_ref[pl.ds(half, half), :].astype(jnp.float32) \
            + (radius * jnp.sin(theta) + mean)
        o_ref[pl.ds(0, half), :] = top.astype(o_ref.dtype)
        o_ref[pl.ds(half, half), :] = bot.astype(o_ref.dtype)
    else:
        # Tiny tile: keep shapes vreg-friendly, skip the pair trick.
        u1 = 2.0 - _bits_to_float12(pltpu.prng_random_bits((r, c)))
        u2 = _bits_to_float12(pltpu.prng_random_bits((r, c))) - 1.0
        normal = jnp.sqrt(-2.0 * jnp.log(u1)) * jnp.cos(_TWO_PI * u2)
        o_ref[...] = (x_ref[...].astype(jnp.float32)
                      + (normal * std + mean)).astype(o_ref.dtype)


# ---------------------------------------------------------------------------
# Fallback path (non-TPU / interpret mode): portable counter-hash PRNG.
# Performance is irrelevant here; this path only exists so the kernel still
# lowers where pltpu.prng_* is unavailable.
# ---------------------------------------------------------------------------

def _srl(x, k):
    """Logical right shift on int32 (arithmetic shift + mask)."""
    return (x >> k) & jnp.int32((1 << (32 - k)) - 1)


def _mix32(x):
    """murmur3 fmix32 avalanche mixer on int32 vectors (wrapping arithmetic)."""
    x = x ^ _srl(x, 16)
    x = x * jnp.int32(_C1)
    x = x ^ _srl(x, 13)
    x = x * jnp.int32(_C2)
    x = x ^ _srl(x, 16)
    return x


def _gaussian_noise_kernel_hash(seed_ref, x_ref, o_ref, *, mean, std, block_rows):
    r, c = x_ref.shape
    tile_off = pl.program_id(0) * (block_rows * _LANES)
    row_ids = lax.broadcasted_iota(jnp.int32, (r, c), 0)
    col_ids = lax.broadcasted_iota(jnp.int32, (r, c), 1)
    ctr = tile_off + row_ids * jnp.int32(c) + col_ids

    seed = seed_ref[0]
    # Two independent counters (2k, 2k+1) so u2 is not a function of u1.
    h1 = _mix32((2 * ctr) ^ seed)
    h2 = _mix32((2 * ctr + 1) ^ seed)

    u1 = (_srl(h1, 8).astype(jnp.float32) + 1.0) * _INV_2_24   # (0, 1]
    u2 = _srl(h2, 8).astype(jnp.float32) * _INV_2_24           # [0, 1)

    normal = jnp.sqrt(-2.0 * jnp.log(u1)) * jnp.cos(_TWO_PI * u2)
    o_ref[...] = (x_ref[...].astype(jnp.float32)
                  + (normal * std + mean)).astype(o_ref.dtype)


# ---------------------------------------------------------------------------
# Wrapper
# ---------------------------------------------------------------------------

@functools.partial(
    jax.jit,
    static_argnames=("mean", "std", "block_rows", "use_hw_prng",
                     "donate_input", "interpret"))
def _gaussian_noise_impl(img, seed, *, mean, std, block_rows, use_hw_prng,
                         donate_input, interpret):
    orig_shape = img.shape
    orig_dtype = img.dtype
    n = img.size

    if n % _VREG_ELEMS == 0:
        # Common case (e.g. NCHW image tensors): free reshape, no pad.
        rows = n // _LANES
        x2d = img.reshape(rows, _LANES)
        pad = 0
    else:
        rows = pl.cdiv(n, _VREG_ELEMS) * _SUBLANES
        pad = rows * _LANES - n
        x2d = jnp.pad(jnp.ravel(img), (0, pad)).reshape(rows, _LANES)

    # Tile sizing: big blocks to amortize per-step overhead, multiple of 8
    # sublanes, and >= 2 tiles on larger inputs so v7x's 2 TCs both get work.
    block_rows = max(_SUBLANES, min(int(block_rows), rows))
    if rows >= 4 * _SUBLANES:
        block_rows = min(block_rows, _round_up(rows // 2, _SUBLANES))
    block_rows = _round_up(block_rows, _SUBLANES)
    grid = (pl.cdiv(rows, block_rows),)

    seed_arr = jnp.asarray(seed, dtype=jnp.int32).reshape(1)

    if use_hw_prng:
        kernel = functools.partial(
            _gaussian_noise_kernel_hw, mean=float(mean), std=float(std))
    else:
        kernel = functools.partial(
            _gaussian_noise_kernel_hash, mean=float(mean), std=float(std),
            block_rows=block_rows)

    n_padded = rows * _LANES
    itemsize = x2d.dtype.itemsize
    cost = pl.CostEstimate(
        flops=int(12 * n_padded),
        transcendentals=int(2 * n_padded),
        bytes_accessed=int(2 * n_padded * itemsize),
    )

    out2d = pl.pallas_call(
        kernel,
        out_shape=jax.ShapeDtypeStruct((rows, _LANES), orig_dtype),
        grid_spec=pltpu.PrefetchScalarGridSpec(
            num_scalar_prefetch=1,
            grid=grid,
            in_specs=[pl.BlockSpec((block_rows, _LANES),
                                   lambda i, seed_ref: (i, 0))],
            out_specs=pl.BlockSpec((block_rows, _LANES),
                                   lambda i, seed_ref: (i, 0)),
        ),
        compiler_params=pltpu.CompilerParams(
            dimension_semantics=("parallel",),
            vmem_limit_bytes=32 * 1024 * 1024,
        ),
        cost_estimate=cost,
        # Only alias when the caller actually donates the image; otherwise XLA
        # would insert a defensive full-array copy before the kernel.
        input_output_aliases=({1: 0} if donate_input else {}),
        interpret=interpret,
    )(seed_arr, x2d)

    if pad:
        return out2d.reshape(-1)[:n].reshape(orig_shape)
    return out2d.reshape(orig_shape)


def gaussian_noise(img, seed, *, mean=0.0, std=1.0, block_rows=4096,
                   use_hw_prng=None, donate_input=False, interpret=False):
    """Apply img + N(mean, std^2) noise with a Pallas TPU kernel.

    img:  any-shape float array (e.g. NCHW image tensor).
    seed: int32 scalar seed (replaces torch's global RNG state).
    """
    if use_hw_prng is None:
        use_hw_prng = (jax.default_backend() == "tpu") and not interpret
    return _gaussian_noise_impl(
        img, seed, mean=float(mean), std=float(std),
        block_rows=int(block_rows), use_hw_prng=bool(use_hw_prng),
        donate_input=bool(donate_input), interpret=bool(interpret))


if __name__ == "__main__":
    key = jax.random.PRNGKey(0)
    # NCHW, matching the PyTorch convention for image tensors.
    x = jax.random.normal(key, (2, 4, 16, 16), dtype=jnp.float32)

    mean, std = 0.5, 2.0
    out = gaussian_noise(x, seed=1234, mean=mean, std=std)
    out = jax.block_until_ready(out)

    assert out.shape == x.shape and out.dtype == x.dtype

    # Sanity check: recovered noise should roughly follow N(mean, std^2).
    noise = out - x
    m = float(jnp.mean(noise))
    s = float(jnp.std(noise))
    assert abs(m - mean) < 0.5, f"noise mean off: {m}"
    assert abs(s - std) < 0.75, f"noise std off: {s}"

    # Smoke-test the ragged (pad) path and the tiny-tile kernel branch.
    x2 = jax.random.normal(jax.random.PRNGKey(1), (3, 5, 7), dtype=jnp.float32)
    out2 = jax.block_until_ready(gaussian_noise(x2, seed=7, mean=0.0, std=1.0))
    assert out2.shape == x2.shape and out2.dtype == x2.dtype
    assert bool(jnp.all(jnp.isfinite(out2)))

    print("KERNEL_OK")
</pallas_src>

<mosaic_0001>
module attributes {stable_mosaic.version = 11 : i64} {
  func.func @_gaussian_noise_kernel_hash(%arg0: i32, %arg1: memref<1xi32, #tpu.memory_space<smem>>, %arg2: memref<16x128xf32, #tpu.memory_space<vmem>>, %arg3: memref<16x128xf32, #tpu.memory_space<vmem>>) attributes {dimension_semantics = [#tpu.dimension_semantics<parallel>], iteration_bounds = array<i64: 1>, scalar_prefetch = 1 : i64, scratch_operands = 0 : i64, tpu.core_type = #tpu.core_type<tc>, window_params = [{transform_indices = @transform_0, window_bounds = array<i64: 16, 128>}, {transform_indices = @transform_1, window_bounds = array<i64: 16, 128>}]} {
    %c2048_i32 = arith.constant 2048 : i32
    %0 = arith.muli %arg0, %c2048_i32 : i32
    %1 = tpu.iota {dimensions = array<i32: 0>} : vector<16x128xi32>
    %2 = tpu.iota {dimensions = array<i32: 1>} : vector<16x128xi32>
    %c128_i32 = arith.constant 128 : i32
    %3 = vector.broadcast %c128_i32 : i32 to vector<16x128xi32>
    %4 = arith.muli %1, %3 : vector<16x128xi32>
    %5 = vector.broadcast %0 : i32 to vector<16x128xi32>
    %6 = arith.addi %5, %4 : vector<16x128xi32>
    %7 = arith.addi %6, %2 : vector<16x128xi32>
    %c0 = arith.constant 0 : index
    %8 = memref.load %arg1[%c0] : memref<1xi32, #tpu.memory_space<smem>>
    %c2_i32 = arith.constant 2 : i32
    %9 = vector.broadcast %c2_i32 : i32 to vector<16x128xi32>
    %10 = arith.muli %9, %7 : vector<16x128xi32>
    %11 = vector.broadcast %8 : i32 to vector<16x128xi32>
    %12 = arith.xori %10, %11 : vector<16x128xi32>
    %c16_i32 = arith.constant 16 : i32
    %13 = vector.broadcast %c16_i32 : i32 to vector<16x128xi32>
    %14 = arith.shrsi %12, %13 : vector<16x128xi32>
    %c65535_i32 = arith.constant 65535 : i32
    %15 = vector.broadcast %c65535_i32 : i32 to vector<16x128xi32>
    %16 = arith.andi %14, %15 : vector<16x128xi32>
    %17 = arith.xori %12, %16 : vector<16x128xi32>
    %c-2048144789_i32 = arith.constant -2048144789 : i32
    %18 = vector.broadcast %c-2048144789_i32 : i32 to vector<16x128xi32>
    %19 = arith.muli %17, %18 : vector<16x128xi32>
    %c13_i32 = arith.constant 13 : i32
    %20 = vector.broadcast %c13_i32 : i32 to vector<16x128xi32>
    %21 = arith.shrsi %19, %20 : vector<16x128xi32>
    %c524287_i32 = arith.constant 524287 : i32
    %22 = vector.broadcast %c524287_i32 : i32 to vector<16x128xi32>
    %23 = arith.andi %21, %22 : vector<16x128xi32>
    %24 = arith.xori %19, %23 : vector<16x128xi32>
    %c-1028477387_i32 = arith.constant -1028477387 : i32
    %25 = vector.broadcast %c-1028477387_i32 : i32 to vector<16x128xi32>
    %26 = arith.muli %24, %25 : vector<16x128xi32>
    %c16_i32_0 = arith.constant 16 : i32
    %27 = vector.broadcast %c16_i32_0 : i32 to vector<16x128xi32>
    %28 = arith.shrsi %26, %27 : vector<16x128xi32>
    %c65535_i32_1 = arith.constant 65535 : i32
    %29 = vector.broadcast %c65535_i32_1 : i32 to vector<16x128xi32>
    %30 = arith.andi %28, %29 : vector<16x128xi32>
    %31 = arith.xori %26, %30 : vector<16x128xi32>
    %c2_i32_2 = arith.constant 2 : i32
    %32 = vector.broadcast %c2_i32_2 : i32 to vector<16x128xi32>
    %33 = arith.muli %32, %7 : vector<16x128xi32>
    %c1_i32 = arith.constant 1 : i32
    %34 = vector.broadcast %c1_i32 : i32 to vector<16x128xi32>
    %35 = arith.addi %33, %34 : vector<16x128xi32>
    %36 = vector.broadcast %8 : i32 to vector<16x128xi32>
    %37 = arith.xori %35, %36 : vector<16x128xi32>
    %c16_i32_3 = arith.constant 16 : i32
    %38 = vector.broadcast %c16_i32_3 : i32 to vector<16x128xi32>
    %39 = arith.shrsi %37, %38 : vector<16x128xi32>
    %c65535_i32_4 = arith.constant 65535 : i32
    %40 = vector.broadcast %c65535_i32_4 : i32 to vector<16x128xi32>
    %41 = arith.andi %39, %40 : vector<16x128xi32>
    %42 = arith.xori %37, %41 : vector<16x128xi32>
    %c-2048144789_i32_5 = arith.constant -2048144789 : i32
    %43 = vector.broadcast %c-2048144789_i32_5 : i32 to vector<16x128xi32>
    %44 = arith.muli %42, %43 : vector<16x128xi32>
    %c13_i32_6 = arith.constant 13 : i32
    %45 = vector.broadcast %c13_i32_6 : i32 to vector<16x128xi32>
    %46 = arith.shrsi %44, %45 : vector<16x128xi32>
    %c524287_i32_7 = arith.constant 524287 : i32
    %47 = vector.broadcast %c524287_i32_7 : i32 to vector<16x128xi32>
    %48 = arith.andi %46, %47 : vector<16x128xi32>
    %49 = arith.xori %44, %48 : vector<16x128xi32>
    %c-1028477387_i32_8 = arith.constant -1028477387 : i32
    %50 = vector.broadcast %c-1028477387_i32_8 : i32 to vector<16x128xi32>
    %51 = arith.muli %49, %50 : vector<16x128xi32>
    %c16_i32_9 = arith.constant 16 : i32
    %52 = vector.broadcast %c16_i32_9 : i32 to vector<16x128xi32>
    %53 = arith.shrsi %51, %52 : vector<16x128xi32>
    %c65535_i32_10 = arith.constant 65535 : i32
    %54 = vector.broadcast %c65535_i32_10 : i32 to vector<16x128xi32>
    %55 = arith.andi %53, %54 : vector<16x128xi32>
    %56 = arith.xori %51, %55 : vector<16x128xi32>
    %c8_i32 = arith.constant 8 : i32
    %57 = vector.broadcast %c8_i32 : i32 to vector<16x128xi32>
    %58 = arith.shrsi %31, %57 : vector<16x128xi32>
    %c16777215_i32 = arith.constant 16777215 : i32
    %59 = vector.broadcast %c16777215_i32 : i32 to vector<16x128xi32>
    %60 = arith.andi %58, %59 : vector<16x128xi32>
    %61 = arith.sitofp %60 : vector<16x128xi32> to vector<16x128xf32>
    %cst = arith.constant 1.000000e+00 : f32
    %62 = vector.broadcast %cst : f32 to vector<16x128xf32>
    %63 = arith.addf %61, %62 : vector<16x128xf32>
    %cst_11 = arith.constant 5.96046448E-8 : f32
    %64 = vector.broadcast %cst_11 : f32 to vector<16x128xf32>
    %65 = arith.mulf %63, %64 : vector<16x128xf32>
    %c8_i32_12 = arith.constant 8 : i32
    %66 = vector.broadcast %c8_i32_12 : i32 to vector<16x128xi32>
    %67 = arith.shrsi %56, %66 : vector<16x128xi32>
    %c16777215_i32_13 = arith.constant 16777215 : i32
    %68 = vector.broadcast %c16777215_i32_13 : i32 to vector<16x128xi32>
    %69 = arith.andi %67, %68 : vector<16x128xi32>
    %70 = arith.sitofp %69 : vector<16x128xi32> to vector<16x128xf32>
    %cst_14 = arith.constant 5.96046448E-8 : f32
    %71 = vector.broadcast %cst_14 : f32 to vector<16x128xf32>
    %72 = arith.mulf %70, %71 : vector<16x128xf32>
    %73 = math.log %65 : vector<16x128xf32>
    %cst_15 = arith.constant -2.000000e+00 : f32
    %74 = vector.broadcast %cst_15 : f32 to vector<16x128xf32>
    %75 = arith.mulf %74, %73 : vector<16x128xf32>
    %76 = math.sqrt %75 : vector<16x128xf32>
    %cst_16 = arith.constant 6.28318548 : f32
    %77 = vector.broadcast %cst_16 : f32 to vector<16x128xf32>
    %78 = arith.mulf %77, %72 : vector<16x128xf32>
    %79 = math.cos %78 : vector<16x128xf32>
    %80 = arith.mulf %76, %79 : vector<16x128xf32>
    %c0_17 = arith.constant 0 : index
    %c0_18 = arith.constant 0 : index
    %81 = vector.load %arg2[%c0_17, %c0_18] : memref<16x128xf32, #tpu.memory_space<vmem>>, vector<16x128xf32>
    %cst_19 = arith.constant 2.000000e+00 : f32
    %82 = vector.broadcast %cst_19 : f32 to vector<16x128xf32>
    %83 = arith.mulf %80, %82 : vector<16x128xf32>
    %cst_20 = arith.constant 5.000000e-01 : f32
    %84 = vector.broadcast %cst_20 : f32 to vector<16x128xf32>
    %85 = arith.addf %83, %84 : vector<16x128xf32>
    %86 = arith.addf %81, %85 : vector<16x128xf32>
    %c0_21 = arith.constant 0 : index
    %c0_22 = arith.constant 0 : index
    %87 = vector.load %arg3[%c0_21, %c0_22] : memref<16x128xf32, #tpu.memory_space<vmem>>, vector<16x128xf32>
    tpu.vector_store %arg3[%c0_21, %c0_22], %86 {strides = array<i32>} : memref<16x128xf32, #tpu.memory_space<vmem>>, vector<16x128xf32>,
    return
  }
  func.func @transform_0(%arg0: i32, %arg1: memref<1xi32, #tpu.memory_space<smem>>) -> (i32, i32) {
    %c0_i32 = arith.constant 0 : i32
    %c0_i32_0 = arith.constant 0 : i32
    return %arg0, %c0_i32 : i32, i32
  }
  func.func @transform_1(%arg0: i32, %arg1: memref<1xi32, #tpu.memory_space<smem>>) -> (i32, i32) {
    %c0_i32 = arith.constant 0 : i32
    %c0_i32_0 = arith.constant 0 : i32
    return %arg0, %c0_i32 : i32, i32
  }
}

</mosaic_0001>

<llo_original>
// kernel: _gaussian_noise_impl.1
$region0: #{_gaussian_noise_impl.1}
  #allocation0 [shape = 'u32[]', space=smem, size = 0x4, offset = 0x4, fixed_abs, tag = 'smem constant byte address 0x4 - core index']
  #allocation1 [shape = 'u32[144,128]{1,0:T(1,128)}', space=vmem, size = 0x12000, scoped, tag = 'internal scratch']
  #allocation2 [shape = 's32[1]{0}', space=sflag, size = 0x4, scoped, tag = 'scoped memory for _gaussian_noise_impl.1']
  #allocation3 [shape = 's32[1]{0:T(128)S(6)}', space=smem, size = 0x200, scoped, tag = 'prefetched SMEM operand 0']
  %s0 = inlined_call_operand.<no memory space> [shape: s32[1], index: 0, kind: input, shape index: {}]
  %s1 = inlined_call_operand.vmem [shape: f32[16,128], index: 1, kind: input, shape index: {}]
  %s2 = inlined_call_operand.vmem [shape: f32[16,128], index: 2, kind: output, shape index: {}]
  %s3 = sld [smem:[#allocation0]]
  $region14: #{_gaussian_noise_impl.1} parent=0
    _
  %s5 = ssub.s32 1, %s3
  %s6 = scalar_select 0, %s5, %s3
  %7 = sst [smem:[#allocation3]] %s0
  // Predicated region
  $region2: #{_gaussian_noise_impl.1} parent=0 // pred_check
    _
  $region3: #{_gaussian_noise_impl.1} parent=0 // pred_check_branch
    %9 = sbr.rel (0) target = $region5
  $region4: #{_gaussian_noise_impl.1} parent=0 // pred_region
    _
  $region5: #{_gaussian_noise_impl.1} parent=0 // pred_fallthru
    _
  %s10 = smul.u32 0, 2048
  %v11 = vlaneseq
  %v12 = vshrl.u32 %v11, 7
  %v13 = vadd.s32 %v12, 8
  %v14 = vlaneseq
  %v15 = vand.u32 %v14, 127
  %v16 = vmul.u32 %v12, 128
  %v17 = vmul.u32 %v13, 128
  %v18 = vstv %s10
  %v19 = vadd.s32 %v18, %v16
  %v20 = vadd.s32 %v18, %v17
  %v21 = vadd.s32 %v19, %v15
  %v22 = vadd.s32 %v20, %v15
  %s23 = sld [smem:[#allocation3]]
  %v24 = vmul.u32 %v21, 2
  %v25 = vmul.u32 %v22, 2
  %v26 = vstv %s23
  %v27 = vxor.u32 %v24, %v26
  %v28 = vxor.u32 %v25, %v26
  %v29 = vshra.s32 %v27, 16
  %v30 = vshra.s32 %v28, 16
  %v31 = vand.u32 %v29, 65535
  %v32 = vand.u32 %v30, 65535
  %v33 = vxor.u32 %v27, %v31
  %v34 = vxor.u32 %v28, %v32
  %v35 = vmul.u32 %v33, 2246822507
  %v36 = vmul.u32 %v34, 2246822507
  %v37 = vshra.s32 %v35, 13
  %v38 = vshra.s32 %v36, 13
  %v39 = vand.u32 %v37, 524287
  %v40 = vand.u32 %v38, 524287
  %v41 = vxor.u32 %v35, %v39
  %v42 = vxor.u32 %v36, %v40
  %v43 = vmul.u32 %v41, 3266489909
  %v44 = vmul.u32 %v42, 3266489909
  %v45 = vshra.s32 %v43, 16
  %v46 = vshra.s32 %v44, 16
  %v47 = vand.u32 %v45, 65535
  %v48 = vand.u32 %v46, 65535
  %v49 = vxor.u32 %v43, %v47
  %v50 = vxor.u32 %v44, %v48
  %v51 = vadd.s32 %v24, 1
  %v52 = vadd.s32 %v25, 1
  %v53 = vxor.u32 %v51, %v26
  %v54 = vxor.u32 %v52, %v26
  %v55 = vshra.s32 %v53, 16
  %v56 = vshra.s32 %v54, 16
  %v57 = vand.u32 %v55, 65535
  %v58 = vand.u32 %v56, 65535
  %v59 = vxor.u32 %v53, %v57
  %v60 = vxor.u32 %v54, %v58
  %v61 = vmul.u32 %v59, 2246822507
  %v62 = vmul.u32 %v60, 2246822507
  %v63 = vshra.s32 %v61, 13
  %v64 = vshra.s32 %v62, 13
  %v65 = vand.u32 %v63, 524287
  %v66 = vand.u32 %v64, 524287
  %v67 = vxor.u32 %v61, %v65
  %v68 = vxor.u32 %v62, %v66
  %v69 = vmul.u32 %v67, 3266489909
  %v70 = vmul.u32 %v68, 3266489909
  %v71 = vshra.s32 %v69, 16
  %v72 = vshra.s32 %v70, 16
  %v73 = vand.u32 %v71, 65535
  %v74 = vand.u32 %v72, 65535
  %v75 = vxor.u32 %v69, %v73
  %v76 = vxor.u32 %v70, %v74
  %v77 = vshra.s32 %v49, 8
  %v78 = vshra.s32 %v50, 8
  %v79 = vand.u32 %v77, 16777215
  %v80 = vand.u32 %v78, 16777215
  %v81 = vcvt.s32.f32 %v79
  %v82 = vcvt.s32.f32 %v80
  %v83 = vadd.f32 %v81, 1.0
  %v84 = vadd.f32 %v82, 1.0
  %v85 = vmul.f32 %v83, 5.9604645e-08
  %v86 = vmul.f32 %v84, 5.9604645e-08
  %v87 = vshra.s32 %v75, 8
  %v88 = vshra.s32 %v76, 8
  %v89 = vand.u32 %v87, 16777215
  %v90 = vand.u32 %v88, 16777215
  %v91 = vcvt.s32.f32 %v89
  %v92 = vcvt.s32.f32 %v90
  %v93 = vmul.f32 %v91, 5.9604645e-08
  %v94 = vmul.f32 %v92, 5.9604645e-08
  %v95 = vlog2.pop %v85
  %v96 = vmul.f32 %v95, 0.6931472
  %v97 = vlog2.pop %v86
  %v98 = vmul.f32 %v97, 0.6931472
  %v99 = vmul.f32 %v96, -2.0
  %v100 = vmul.f32 %v98, -2.0
  %v101 = vrsqrt.pop %v99
  %v102 = vmul.f32 %v99, %v101
  %vm103 = vcmp.eq.f32.partialorder %v99, inf
  %v104 = vsel %vm103, %v99, %v102
  %vm105 = vcmp.eq.f32.partialorder %v99, 0.0
  %v106 = vand.u32 %v99, 2147483648
  %v107 = vsel %vm105, %v106, %v104
  %v108 = vrsqrt.pop %v100
  %v109 = vmul.f32 %v100, %v108
  %vm110 = vcmp.eq.f32.partialorder %v100, inf
  %v111 = vsel %vm110, %v100, %v109
  %vm112 = vcmp.eq.f32.partialorder %v100, 0.0
  %v113 = vand.u32 %v100, 2147483648
  %v114 = vsel %vm112, %v113, %v111
  %v115 = vmul.f32 %v93, 6.2831855
  %v116 = vmul.f32 %v94, 6.2831855
  %v117 = vand.u32 2147483647, %v115
  %vm118 = vcmp.le.f32.partialorder %v117, 0.7853982
  %vm119 = vcmp.lt.s32.totalorder %v115, 0
  %v120 = vand.u32 %v115, 2139095040
  %v121 = vshrl.u32 %v120, 23
  %v122 = vsub.s32 %v121, 127
  %v123 = vand.u32 2147483647, %v115
  %v124 = vand.u32 %v123, 8388607
  %v125 = vor.u32 %v124, 8388608
  %v126 = vsub.s32 0, %v125
  %v127 = vadd.s32 %v122, 1
  %vm128 = vcmp.gt.s32.totalorder %v127, 0
  %v129 = vsel %vm128, %v127, 0
  %v130 = vshrl.u32 %v129, 5
  %v131 = vand.u32 %v129, 31
  %v132 = vsub.s32 32, %v131
  %v133 = vshrl.u32 683565275, %v132
  %v134 = vshll.u32 683565275, %v131
  %v135 = vshrl.u32 2475754826, %v132
  %v136 = vor.u32 %v134, %v135
  %v137 = vshll.u32 2475754826, %v131
  %v138 = vshrl.u32 2131351028, %v132
  %v139 = vor.u32 %v137, %v138
  %v140 = vshll.u32 2131351028, %v131
  %v141 = vshrl.u32 2102212464, %v132
  %v142 = vor.u32 %v140, %v141
  %v143 = vshll.u32 2102212464, %v131
  %v144 = vshrl.u32 920167782, %v132
  %v145 = vor.u32 %v143, %v144
  %v146 = vshll.u32 920167782, %v131
  %v147 = vshrl.u32 1326507024, %v132
  %v148 = vor.u32 %v146, %v147
  %vm149 = vcmp.lt.s32.totalorder %v130, 1
  %vm150 = vcmp.lt.s32.totalorder %v130, 2
  %vm151 = vcmp.lt.s32.totalorder %v130, 3
  %vm152 = vcmp.lt.s32.totalorder %v130, 4
  %v153 = vsel %vm149, %v133, %v136
  %v154 = vsel %vm152, %v142, 2102212464
  %v155 = vsel %vm151, %v139, %v154
  %v156 = vsel %vm150, %v153, %v155
  %v157 = vsel %vm149, %v136, %v139
  %v158 = vsel %vm152, %v145, 920167782
  %v159 = vsel %vm151, %v142, %v158
  %v160 = vsel %vm150, %v157, %v159
  %v161 = vsel %vm149, %v139, %v142
  %v162 = vsel %vm152, %v148, 1326507024
  %v163 = vsel %vm151, %v145, %v162
  %v164 = vsel %vm150, %v161, %v163
  %v165 = vshll.u32 %v125, 8
  %v166 = vmul.u32.u64.compose %v165, %v164
  %v167 = vextract.low.u32 %v166
  %v168 = vextract.high.u32 %v166
  %v169 = vmul.u32.u64.compose %v165, %v160
  %v170 = vextract.low.u32 %v169
  %v171 = vextract.high.u32 %v169
  %v172 = vmul.u32 %v165, %v156
  %v173 = vadd.s32 %v168, %v170
  %vm174 = vc.u32 %v168, %v170
  %v175 = vadd.s32 %v171, 1
  %v176 = vsel %vm174, %v175, %v171
  %v177 = vadd.s32 %v172, %v176
  %v178 = vadd.s32 %v177, 536870912
  %v179 = vshrl.u32 %v178, 30
  %v180 = vshll.u32 %v179, 30
  %v181 = vsub.s32 %v177, %v180
  %vm182 = vcmp.lt.s32.totalorder %v181, 0
  %v183 = vsub.s32 0, %v181
  %v184 = vsel %vm182, %v183, %v181
  %v185 = vclz %v184
  %v186 = vsub.s32 %v185, 2
  %vm187 = vcmp.gt.s32.totalorder 0, %v186
  %v188 = vsel %vm187, 0, %v186
  %v189 = vsub.s32 32, %v188
  %v190 = vshll.u32 %v181, %v188
  %v191 = vshrl.u32 %v173, %v189
  %v192 = vor.u32 %v190, %v191
  %v193 = vsub.s32 4294967266, %v188
  %v194 = vadd.s32 %v193, 127
  %v195 = vshll.u32 %v194, 23
  %v196 = vor.u32 4788187, %v195
  %v197 = vand.u32 2147483647, %v196
  %v199 = vcvt.s32.f32 %v192
  %v200 = vmul.f32 %v199, %v197
  %v201 = vxor.u32 %v200, 2147483648
  %v202 = vsel %vm119, %v201, %v200
  %v203 = vsub.s32 4, %v179
  %v204 = vsel %vm119, %v203, %v179
  %v205 = vsel %vm118, %v115, %v202
  %v206 = vsel %vm118, 0, %v204
  %v207 = vcosq.f32.pop %v205
  %v208 = vsinq.f32.pop %v205
  %vm209 = vweird.f32 %v115
  %v210 = vand.u32 %v206, 3
  %vm211 = vcmp.lt.s32.totalorder %v210, 2
  %vm212 = vcmp.eq.s32.totalorder %v210, 0
  %v213 = vxor.u32 %v208, 2147483648
  %v214 = vsel %vm212, %v207, %v213
  %vm215 = vcmp.eq.s32.totalorder %v210, 2
  %v216 = vxor.u32 %v207, 2147483648
  %v217 = vsel %vm215, %v216, %v208
  %v218 = vsel %vm211, %v214, %v217
  %v219 = vsel %vm209, nan, %v218
  %v220 = vand.u32 2147483647, %v116
  %vm221 = vcmp.le.f32.partialorder %v220, 0.7853982
  %vm222 = vcmp.lt.s32.totalorder %v116, 0
  %v223 = vand.u32 %v116, 2139095040
  %v224 = vshrl.u32 %v223, 23
  %v225 = vsub.s32 %v224, 127
  %v226 = vand.u32 2147483647, %v116
  %v227 = vand.u32 %v226, 8388607
  %v228 = vor.u32 %v227, 8388608
  %v229 = vsub.s32 0, %v228
  %v230 = vadd.s32 %v225, 1
  %vm231 = vcmp.gt.s32.totalorder %v230, 0
  %v232 = vsel %vm231, %v230, 0
  %v233 = vshrl.u32 %v232, 5
  %v234 = vand.u32 %v232, 31
  %v235 = vsub.s32 32, %v234
  %v236 = vshrl.u32 683565275, %v235
  %v237 = vshll.u32 683565275, %v234
  %v238 = vshrl.u32 2475754826, %v235
  %v239 = vor.u32 %v237, %v238
  %v240 = vshll.u32 2475754826, %v234
  %v241 = vshrl.u32 2131351028, %v235
  %v242 = vor.u32 %v240, %v241
  %v243 = vshll.u32 2131351028, %v234
  %v244 = vshrl.u32 2102212464, %v235
  %v245 = vor.u32 %v243, %v244
  %v246 = vshll.u32 2102212464, %v234
  %v247 = vshrl.u32 920167782, %v235
  %v248 = vor.u32 %v246, %v247
  %v249 = vshll.u32 920167782, %v234
  %v250 = vshrl.u32 1326507024, %v235
  %v251 = vor.u32 %v249, %v250
  %vm252 = vcmp.lt.s32.totalorder %v233, 1
  %vm253 = vcmp.lt.s32.totalorder %v233, 2
  %vm254 = vcmp.lt.s32.totalorder %v233, 3
  %vm255 = vcmp.lt.s32.totalorder %v233, 4
  %v256 = vsel %vm252, %v236, %v239
  %v257 = vsel %vm255, %v245, 2102212464
  %v258 = vsel %vm254, %v242, %v257
  %v259 = vsel %vm253, %v256, %v258
  %v260 = vsel %vm252, %v239, %v242
  %v261 = vsel %vm255, %v248, 920167782
  %v262 = vsel %vm254, %v245, %v261
  %v263 = vsel %vm253, %v260, %v262
  %v264 = vsel %vm252, %v242, %v245
  %v265 = vsel %vm255, %v251, 1326507024
  %v266 = vsel %vm254, %v248, %v265
  %v267 = vsel %vm253, %v264, %v266
  %v268 = vshll.u32 %v228, 8
  %v269 = vmul.u32.u64.compose %v268, %v267
  %v270 = vextract.low.u32 %v269
  %v271 = vextract.high.u32 %v269
  %v272 = vmul.u32.u64.compose %v268, %v263
  %v273 = vextract.low.u32 %v272
  %v274 = vextract.high.u32 %v272
  %v275 = vmul.u32 %v268, %v259
  %v276 = vadd.s32 %v271, %v273
  %vm277 = vc.u32 %v271, %v273
  %v278 = vadd.s32 %v274, 1
  %v279 = vsel %vm277, %v278, %v274
  %v280 = vadd.s32 %v275, %v279
  %v281 = vadd.s32 %v280, 536870912
  %v282 = vshrl.u32 %v281, 30
  %v283 = vshll.u32 %v282, 30
  %v284 = vsub.s32 %v280, %v283
  %vm285 = vcmp.lt.s32.totalorder %v284, 0
  %v286 = vsub.s32 0, %v284
  %v287 = vsel %vm285, %v286, %v284
  %v288 = vclz %v287
  %v289 = vsub.s32 %v288, 2
  %vm290 = vcmp.gt.s32.totalorder 0, %v289
  %v291 = vsel %vm290, 0, %v289
  %v292 = vsub.s32 32, %v291
  %v293 = vshll.u32 %v284, %v291
  %v294 = vshrl.u32 %v276, %v292
  %v295 = vor.u32 %v293, %v294
  %v296 = vsub.s32 4294967266, %v291
  %v297 = vadd.s32 %v296, 127
  %v298 = vshll.u32 %v297, 23
  %v299 = vor.u32 4788187, %v298
  %v300 = vand.u32 2147483647, %v299
  %v302 = vcvt.s32.f32 %v295
  %v303 = vmul.f32 %v302, %v300
  %v304 = vxor.u32 %v303, 2147483648
  %v305 = vsel %vm222, %v304, %v303
  %v306 = vsub.s32 4, %v282
  %v307 = vsel %vm222, %v306, %v282
  %v308 = vsel %vm221, %v116, %v305
  %v309 = vsel %vm221, 0, %v307
  %v310 = vcosq.f32.pop %v308
  %v311 = vsinq.f32.pop %v308
  %vm312 = vweird.f32 %v116
  %v313 = vand.u32 %v309, 3
  %vm314 = vcmp.lt.s32.totalorder %v313, 2
  %vm315 = vcmp.eq.s32.totalorder %v313, 0
  %v316 = vxor.u32 %v311, 2147483648
  %v317 = vsel %vm315, %v310, %v316
  %vm318 = vcmp.eq.s32.totalorder %v313, 2
  %v319 = vxor.u32 %v310, 2147483648
  %v320 = vsel %vm318, %v319, %v311
  %v321 = vsel %vm314, %v317, %v320
  %v322 = vsel %vm312, nan, %v321
  %v323 = vmul.f32 %v107, %v219
  %v324 = vmul.f32 %v114, %v322
  %v325 = vld [vmem:[%s1] sm:$0xff]
  %v326 = vld [vmem:[%s1 + $0x8] sm:$0xff]
  %v327 = vmul.f32 %v323, 2.0
  %v328 = vmul.f32 %v324, 2.0
  %v329 = vadd.f32 %v327, 0.5
  %v330 = vadd.f32 %v328, 0.5
  %v331 = vadd.f32 %v325, %v329
  %v332 = vadd.f32 %v326, %v330
  %333 = vst [vmem:[%s2] sm:$0xff] %v331
  %334 = vst [vmem:[%s2 + $0x8] sm:$0xff] %v332
  // Predicated region
  $region6: #{_gaussian_noise_impl.1} parent=0 // pred_check
    _
  $region7: #{_gaussian_noise_impl.1} parent=0 // pred_check_branch
    %336 = sbr.rel (0) target = $region9
  $region8: #{_gaussian_noise_impl.1} parent=0 // pred_region
    _
  $region9: #{_gaussian_noise_impl.1} parent=0 // pred_fallthru
    _
  // Predicated region
  $region10: #{_gaussian_noise_impl.1} parent=0 // pred_check
    _
  $region11: #{_gaussian_noise_impl.1} parent=0 // pred_check_branch
    %338 = sbr.rel (0) target = $region13
  $region12: #{_gaussian_noise_impl.1} parent=0 // pred_region
    _
  $region13: #{_gaussian_noise_impl.1} parent=0 // pred_fallthru
    _

</llo_original>
